<compile_context>
chip_gen: v7x
topology: tpu7x:2x2x1
jax: 0.10.0
libtpu: 0.0.40
codegen_flags: <defaults>
</compile_context>

<pallas_src>
import functools

import jax
import jax.numpy as jnp
from jax import lax
from jax.experimental import pallas as pl
from jax.experimental.pallas import tpu as pltpu


# ----------------------------------------------------------------------------
# Plain-JAX glue: sample_and_group helpers (PointNet++ style, as in CurveNet)
# ----------------------------------------------------------------------------
def index_points(points, idx):
    """points: (B, N, C); idx: (B, ...) int -> (B, ..., C)."""
    B = points.shape[0]
    batch_idx = jnp.arange(B, dtype=idx.dtype).reshape((B,) + (1,) * (idx.ndim - 1))
    return points[batch_idx, idx]


def farthest_point_sample(xyz, npoint):
    """xyz: (B, N, 3) -> (B, npoint) int32 indices (deterministic start at 0)."""
    B, N, _ = xyz.shape

    def body(i, state):
        centroids, distance, farthest = state
        centroids = centroids.at[:, i].set(farthest)
        centroid = jnp.take_along_axis(xyz, farthest[:, None, None], axis=1)  # (B,1,3)
        dist = jnp.sum((xyz - centroid) ** 2, axis=-1)                        # (B,N)
        distance = jnp.minimum(distance, dist)
        farthest = jnp.argmax(distance, axis=-1).astype(jnp.int32)
        return centroids, distance, farthest

    centroids = jnp.zeros((B, npoint), dtype=jnp.int32)
    distance = jnp.full((B, N), 1e10, dtype=xyz.dtype)
    # TODO(synk): PyTorch starts FPS at a random index; fixed to 0 here (deterministic).
    farthest = jnp.zeros((B,), dtype=jnp.int32)
    centroids, _, _ = lax.fori_loop(0, npoint, body, (centroids, distance, farthest))
    return centroids


def query_ball_point(radius, nsample, xyz, new_xyz):
    """xyz: (B,N,3), new_xyz: (B,S,3) -> (B,S,nsample) int32 neighbor indices."""
    B, N, _ = xyz.shape
    sqrdists = jnp.sum((new_xyz[:, :, None, :] - xyz[:, None, :, :]) ** 2, axis=-1)  # (B,S,N)
    group_idx = jnp.broadcast_to(jnp.arange(N, dtype=jnp.int32), sqrdists.shape)
    group_idx = jnp.where(sqrdists > radius ** 2, jnp.int32(N), group_idx)
    # nsample smallest indices (ascending) == sort(...)[..., :nsample]; top_k
    # avoids the full O(N log N) sort over the (B, S, N) matrix.
    neg_topk, _ = lax.top_k(-group_idx, nsample)                                      # (B,S,k)
    group_idx = -neg_topk
    group_first = group_idx[:, :, :1]
    group_idx = jnp.where(group_idx == N, group_first, group_idx)
    # Clamp: matches XLA's OOB-gather clamping for the degenerate "no neighbor
    # within radius" query, and guarantees the fused kernel never reads OOB VMEM.
    return jnp.minimum(group_idx, jnp.int32(N - 1))


# ----------------------------------------------------------------------------
# Primary Pallas kernel: fused SMEM-index gather + in-vreg running max
# ----------------------------------------------------------------------------
def _choose_s_tile(S, C, B, itemsize, budget=1 << 20):
    """Largest multiple-of-8 divisor of S with tS*C*itemsize <= budget,
    preferring >=2 total parallel grid iterations (v7x megacore)."""
    if S < 8 or S % 8 != 0:
        return None
    cands = [t for t in (2048, 1024, 512, 256, 128, 64, 32, 16, 8)
             if S % t == 0 and t * C * itemsize <= budget]
    if not cands:
        return None
    for t in cands:                      # descending -> largest first
        if B * (S // t) >= 2:
            return t
    return cands[-1]


def _fused_gather_max_kernel(idx_ref, pts_ref, out_ref, *, S, tS, k):
    # idx_ref: SMEM, flat (B*S*k,) int32 neighbor indices (scalar prefetch)
    # pts_ref: VMEM (1, N, C) -- whole per-batch points slab, resident over st
    # out_ref: VMEM (1, tS, C) -- pooled features for this S-tile
    b = pl.program_id(0)
    st = pl.program_id(1)
    base = (b * S + st * tS) * k

    @pl.loop(0, tS // 8)
    def _(g):
        rows = []
        for r in range(8):                               # one sublane group
            off = base + (g * 8 + r) * k
            acc = pts_ref[0, pl.ds(idx_ref[off], 1), :]  # (1, C)
            for j in range(1, k):                        # running max in vregs
                acc = jnp.maximum(acc, pts_ref[0, pl.ds(idx_ref[off + j], 1), :])
            rows.append(acc)
        slab = jnp.concatenate(rows, axis=0)             # (8, C)
        out_ref[0, pl.ds(pl.multiple_of(g * 8, 8), 8), :] = slab


def _fused_neighbor_max(points, idx, tS):
    """points: (B, N, C), idx: (B, S, k) int32 -> (B, S, C) max over neighbors."""
    B, N, C = points.shape
    _, S, k = idx.shape
    dtype = points.dtype
    itemsize = jnp.dtype(dtype).itemsize

    idx_flat = idx.reshape(-1).astype(jnp.int32)

    kernel = functools.partial(_fused_gather_max_kernel, S=S, tS=tS, k=k)

    pts_blk = N * C * itemsize
    out_blk = tS * C * itemsize
    # double-buffered input + output blocks + margin, capped below v7x scoped VMEM
    vmem_limit = int(min(max(2 * (pts_blk + out_blk) + (2 << 20), 8 << 20), 32 << 20))

    flops = B * S * k * C                                     # one compare/select per elem
    bytes_accessed = (B * N * C + B * S * C) * itemsize + idx_flat.size * 4

    return pl.pallas_call(
        kernel,
        out_shape=jax.ShapeDtypeStruct((B, S, C), dtype),
        grid_spec=pltpu.PrefetchScalarGridSpec(
            num_scalar_prefetch=1,
            grid=(B, S // tS),
            in_specs=[pl.BlockSpec((1, N, C), lambda b, st, idx_sm: (b, 0, 0))],
            out_specs=pl.BlockSpec((1, tS, C), lambda b, st, idx_sm: (b, st, 0)),
        ),
        compiler_params=pltpu.CompilerParams(
            dimension_semantics=("parallel", "parallel"),
            vmem_limit_bytes=vmem_limit,
        ),
        cost_estimate=pl.CostEstimate(
            flops=flops, transcendentals=0, bytes_accessed=bytes_accessed),
    )(idx_flat, points)


# ----------------------------------------------------------------------------
# Fallback Pallas kernel: XLA gather, k folded into the block, S*C lane-flat
# ----------------------------------------------------------------------------
def _choose_l_tile(L, k, itemsize):
    for t in (131072, 65536, 32768, 16384, 8192, 4096, 2048, 1024, 512, 256, 128):
        if L % t == 0 and 2 * (k + 1) * t * itemsize <= (16 << 20):
            return t
    return L  # full-extent block is always legal


def _folded_max_kernel(g_ref, o_ref):
    # g_ref: (1, k, 1, tL); o_ref: (1, 1, tL).  Max over the leading neighbor
    # axis -> elementwise VPU max, accumulation stays in vregs, one lane-dense
    # store per tile.
    o_ref[0] = jnp.max(g_ref[0], axis=0)


def _folded_neighbor_max(grouped):
    """grouped: (B, k, S, C) -> (B, S, C) max over the neighbor axis k."""
    B, k, S, C = grouped.shape
    dtype = grouped.dtype
    itemsize = jnp.dtype(dtype).itemsize
    L = S * C
    g = grouped.reshape(B, k, 1, L)
    tL = _choose_l_tile(L, k, itemsize)

    in_blk = k * tL * itemsize
    out_blk = tL * itemsize
    vmem_limit = int(min(max(2 * (in_blk + out_blk) + (2 << 20), 8 << 20), 32 << 20))

    flops = B * k * L
    bytes_accessed = (B * k * L + B * L) * itemsize

    pooled = pl.pallas_call(
        _folded_max_kernel,
        out_shape=jax.ShapeDtypeStruct((B, 1, L), dtype),
        grid_spec=pltpu.PrefetchScalarGridSpec(
            num_scalar_prefetch=0,
            grid=(B, L // tL),
            in_specs=[pl.BlockSpec((1, k, 1, tL), lambda b, l: (b, 0, 0, l))],
            out_specs=pl.BlockSpec((1, 1, tL), lambda b, l: (b, 0, l)),
        ),
        compiler_params=pltpu.CompilerParams(
            dimension_semantics=("parallel", "parallel"),
            vmem_limit_bytes=vmem_limit,
        ),
        cost_estimate=pl.CostEstimate(
            flops=flops, transcendentals=0, bytes_accessed=bytes_accessed),
    )(g)
    return pooled.reshape(B, S, C)


# ----------------------------------------------------------------------------
# MaskedMaxPool.forward
# ----------------------------------------------------------------------------
@functools.partial(jax.jit, static_argnums=(2, 3, 4))
def masked_max_pool(xyz, features, npoint, radius, k):
    """
    xyz:      (B, N, 3)    float32
    features: (B, C, N)    float32  (channels-first, like the PyTorch module)
    returns:  sub_xyz (B, npoint, 3), sub_features (B, 3 + C, npoint)
    """
    B, C, N = features.shape
    points = jnp.transpose(features, (0, 2, 1))              # (B, N, C) row-gather layout

    # --- sample_and_group glue (data-dependent selection stays in plain JAX) ---
    fps_idx = farthest_point_sample(xyz, npoint)             # (B, S)
    new_xyz = index_points(xyz, fps_idx)                     # (B, S, 3)
    idx = query_ball_point(radius, k, xyz, new_xyz)          # (B, S, k) int32, clamped

    # xyz branch: only 3 lanes wide -> keep in XLA so the kernel output stays
    # lane-dense (no 3+C concat / masked partial stores inside the kernel).
    grouped_xyz = index_points(xyz, idx)                     # (B, S, k, 3)
    pooled_xyz = jnp.max(grouped_xyz - new_xyz[:, :, None, :], axis=2)   # (B, S, 3)

    itemsize = jnp.dtype(points.dtype).itemsize
    tS = _choose_s_tile(npoint, C, B, itemsize)
    fused_ok = (
        tS is not None
        and N * C * itemsize <= (12 << 20)        # per-batch points slab fits VMEM
        and B * npoint * k <= (1 << 16)           # prefetched idx fits comfortably in SMEM
    )

    if fused_ok:
        # Fused gather + max: no (B, k, S, C) HBM intermediate.
        pooled_feat = _fused_neighbor_max(points, idx, tS)               # (B, S, C)
    else:
        # TODO(synk): for very large B*S*k / N*C, tile idx into SMEM per grid step
        # (blocked SMEM in_spec) instead of falling back to the HBM-materialized gather.
        idx_t = jnp.transpose(idx, (0, 2, 1))                            # (B, k, S)
        grouped_feat = index_points(points, idx_t)                       # (B, k, S, C)
        pooled_feat = _folded_neighbor_max(grouped_feat)                 # (B, S, C)

    sub_features = jnp.concatenate([pooled_xyz, pooled_feat], axis=-1)   # (B, S, 3+C)
    sub_features = jnp.transpose(sub_features, (0, 2, 1))                # (B, 3+C, S)
    return new_xyz, sub_features


# ----------------------------------------------------------------------------
# Reference (pure jnp) for a correctness check
# ----------------------------------------------------------------------------
def _reference(xyz, features, npoint, radius, k):
    points = jnp.transpose(features, (0, 2, 1))
    fps_idx = farthest_point_sample(xyz, npoint)
    new_xyz = index_points(xyz, fps_idx)
    idx = query_ball_point(radius, k, xyz, new_xyz)
    grouped_xyz = index_points(xyz, idx)
    grouped_xyz_norm = grouped_xyz - new_xyz[:, :, None, :]
    grouped_points = index_points(points, idx)
    new_points = jnp.concatenate([grouped_xyz_norm, grouped_points], axis=-1)  # (B,S,k,3+C)
    nchw = jnp.transpose(new_points, (0, 3, 1, 2))                             # (B,3+C,S,k)
    sub_features = jnp.max(nchw, axis=-1)                                      # (B,3+C,S)
    return new_xyz, sub_features


def _check(xyz, features, npoint, radius, k):
    sub_xyz, sub_features = masked_max_pool(xyz, features, npoint, radius, k)
    jax.block_until_ready((sub_xyz, sub_features))
    ref_xyz, ref_features = _reference(xyz, features, npoint, radius, k)
    B, C, _ = features.shape                     # features is (B, C, N)
    assert sub_xyz.shape == (B, npoint, 3), sub_xyz.shape
    assert sub_features.shape == (B, 3 + C, npoint), sub_features.shape
    assert jnp.allclose(sub_xyz, ref_xyz)
    assert jnp.allclose(sub_features, ref_features, atol=1e-6)


if __name__ == "__main__":
    key = jax.random.PRNGKey(0)
    k1, k2, k3, k4, k5, k6 = jax.random.split(key, 6)

    # Small spec-aligned case (fused path, tS == S == 8).
    B, N, C = 2, 16, 4
    npoint, radius, knn = 8, 0.4, 8
    xyz = jax.random.uniform(k1, (B, N, 3), dtype=jnp.float32)
    features = jax.random.normal(k2, (B, C, N), dtype=jnp.float32)
    _check(xyz, features, npoint, radius, knn)

    # Larger case exercising the fused kernel with a multi-group S-tile.
    B2, N2, C2 = 2, 256, 128
    npoint2, radius2, knn2 = 128, 0.2, 16
    xyz2 = jax.random.uniform(k3, (B2, N2, 3), dtype=jnp.float32)
    features2 = jax.random.normal(k4, (B2, C2, N2), dtype=jnp.float32)
    _check(xyz2, features2, npoint2, radius2, knn2)

    # npoint not a multiple of 8 -> exercises the folded (non-fused) fallback kernel.
    B3, N3, C3 = 1, 32, 16
    npoint3, radius3, knn3 = 12, 0.3, 4
    xyz3 = jax.random.uniform(k5, (B3, N3, 3), dtype=jnp.float32)
    features3 = jax.random.normal(k6, (B3, C3, N3), dtype=jnp.float32)
    _check(xyz3, features3, npoint3, radius3, knn3)

    print("KERNEL_OK")
</pallas_src>

<mosaic_0001>
module attributes {stable_mosaic.version = 11 : i64} {
  func.func @_fused_gather_max_kernel(%arg0: i32, %arg1: i32, %arg2: memref<128xi32, #tpu.memory_space<smem>>, %arg3: memref<1x16x4xf32, #tpu.memory_space<vmem>>, %arg4: memref<1x8x4xf32, #tpu.memory_space<vmem>>) attributes {dimension_semantics = [#tpu.dimension_semantics<parallel>, #tpu.dimension_semantics<parallel>], iteration_bounds = array<i64: 2, 1>, scalar_prefetch = 1 : i64, scratch_operands = 0 : i64, tpu.core_type = #tpu.core_type<tc>, window_params = [{transform_indices = @transform_0, window_bounds = array<i64: 1, 16, 4>}, {transform_indices = @transform_1, window_bounds = array<i64: 1, 8, 4>}]} {
    %c8_i32 = arith.constant 8 : i32
    %0 = arith.muli %arg0, %c8_i32 : i32
    %c8_i32_0 = arith.constant 8 : i32
    %1 = arith.muli %arg1, %c8_i32_0 : i32
    %2 = arith.addi %0, %1 : i32
    %c8_i32_1 = arith.constant 8 : i32
    %3 = arith.muli %2, %c8_i32_1 : i32
    %c0_i32 = arith.constant 0 : i32
    %c1_i32 = arith.constant 1 : i32
    %4 = arith.muli %c0_i32, %c1_i32 : i32
    %c0_i32_2 = arith.constant 0 : i32
    %5 = arith.addi %c0_i32_2, %4 : i32
    %c8_i32_3 = arith.constant 8 : i32
    %6 = arith.muli %5, %c8_i32_3 : i32
    %c0_i32_4 = arith.constant 0 : i32
    %7 = arith.addi %6, %c0_i32_4 : i32
    %c8_i32_5 = arith.constant 8 : i32
    %8 = arith.muli %7, %c8_i32_5 : i32
    %9 = arith.addi %3, %8 : i32
    %10 = arith.index_cast %9 : i32 to index
    %11 = memref.load %arg2[%10] : memref<128xi32, #tpu.memory_space<smem>>
    %c0 = arith.constant 0 : index
    %12 = arith.index_cast %11 : i32 to index
    %c0_6 = arith.constant 0 : index
    %13 = vector.load %arg3[%c0, %12, %c0_6] : memref<1x16x4xf32, #tpu.memory_space<vmem>>, vector<1x1x4xf32>
    %14 = vector.shape_cast %13 : vector<1x1x4xf32> to vector<1x4xf32>
    %c1_i32_7 = arith.constant 1 : i32
    %15 = arith.addi %9, %c1_i32_7 : i32
    %16 = arith.index_cast %15 : i32 to index
    %17 = memref.load %arg2[%16] : memref<128xi32, #tpu.memory_space<smem>>
    %c0_8 = arith.constant 0 : index
    %18 = arith.index_cast %17 : i32 to index
    %c0_9 = arith.constant 0 : index
    %19 = vector.load %arg3[%c0_8, %18, %c0_9] : memref<1x16x4xf32, #tpu.memory_space<vmem>>, vector<1x1x4xf32>
    %20 = vector.shape_cast %19 : vector<1x1x4xf32> to vector<1x4xf32>
    %21 = arith.maximumf %14, %20 : vector<1x4xf32>
    %c2_i32 = arith.constant 2 : i32
    %22 = arith.addi %9, %c2_i32 : i32
    %23 = arith.index_cast %22 : i32 to index
    %24 = memref.load %arg2[%23] : memref<128xi32, #tpu.memory_space<smem>>
    %c0_10 = arith.constant 0 : index
    %25 = arith.index_cast %24 : i32 to index
    %c0_11 = arith.constant 0 : index
    %26 = vector.load %arg3[%c0_10, %25, %c0_11] : memref<1x16x4xf32, #tpu.memory_space<vmem>>, vector<1x1x4xf32>
    %27 = vector.shape_cast %26 : vector<1x1x4xf32> to vector<1x4xf32>
    %28 = arith.maximumf %21, %27 : vector<1x4xf32>
    %c3_i32 = arith.constant 3 : i32
    %29 = arith.addi %9, %c3_i32 : i32
    %30 = arith.index_cast %29 : i32 to index
    %31 = memref.load %arg2[%30] : memref<128xi32, #tpu.memory_space<smem>>
    %c0_12 = arith.constant 0 : index
    %32 = arith.index_cast %31 : i32 to index
    %c0_13 = arith.constant 0 : index
    %33 = vector.load %arg3[%c0_12, %32, %c0_13] : memref<1x16x4xf32, #tpu.memory_space<vmem>>, vector<1x1x4xf32>
    %34 = vector.shape_cast %33 : vector<1x1x4xf32> to vector<1x4xf32>
    %35 = arith.maximumf %28, %34 : vector<1x4xf32>
    %c4_i32 = arith.constant 4 : i32
    %36 = arith.addi %9, %c4_i32 : i32
    %37 = arith.index_cast %36 : i32 to index
    %38 = memref.load %arg2[%37] : memref<128xi32, #tpu.memory_space<smem>>
    %c0_14 = arith.constant 0 : index
    %39 = arith.index_cast %38 : i32 to index
    %c0_15 = arith.constant 0 : index
    %40 = vector.load %arg3[%c0_14, %39, %c0_15] : memref<1x16x4xf32, #tpu.memory_space<vmem>>, vector<1x1x4xf32>
    %41 = vector.shape_cast %40 : vector<1x1x4xf32> to vector<1x4xf32>
    %42 = arith.maximumf %35, %41 : vector<1x4xf32>
    %c5_i32 = arith.constant 5 : i32
    %43 = arith.addi %9, %c5_i32 : i32
    %44 = arith.index_cast %43 : i32 to index
    %45 = memref.load %arg2[%44] : memref<128xi32, #tpu.memory_space<smem>>
    %c0_16 = arith.constant 0 : index
    %46 = arith.index_cast %45 : i32 to index
    %c0_17 = arith.constant 0 : index
    %47 = vector.load %arg3[%c0_16, %46, %c0_17] : memref<1x16x4xf32, #tpu.memory_space<vmem>>, vector<1x1x4xf32>
    %48 = vector.shape_cast %47 : vector<1x1x4xf32> to vector<1x4xf32>
    %49 = arith.maximumf %42, %48 : vector<1x4xf32>
    %c6_i32 = arith.constant 6 : i32
    %50 = arith.addi %9, %c6_i32 : i32
    %51 = arith.index_cast %50 : i32 to index
    %52 = memref.load %arg2[%51] : memref<128xi32, #tpu.memory_space<smem>>
    %c0_18 = arith.constant 0 : index
    %53 = arith.index_cast %52 : i32 to index
    %c0_19 = arith.constant 0 : index
    %54 = vector.load %arg3[%c0_18, %53, %c0_19] : memref<1x16x4xf32, #tpu.memory_space<vmem>>, vector<1x1x4xf32>
    %55 = vector.shape_cast %54 : vector<1x1x4xf32> to vector<1x4xf32>
    %56 = arith.maximumf %49, %55 : vector<1x4xf32>
    %c7_i32 = arith.constant 7 : i32
    %57 = arith.addi %9, %c7_i32 : i32
    %58 = arith.index_cast %57 : i32 to index
    %59 = memref.load %arg2[%58] : memref<128xi32, #tpu.memory_space<smem>>
    %c0_20 = arith.constant 0 : index
    %60 = arith.index_cast %59 : i32 to index
    %c0_21 = arith.constant 0 : index
    %61 = vector.load %arg3[%c0_20, %60, %c0_21] : memref<1x16x4xf32, #tpu.memory_space<vmem>>, vector<1x1x4xf32>
    %62 = vector.shape_cast %61 : vector<1x1x4xf32> to vector<1x4xf32>
    %63 = arith.maximumf %56, %62 : vector<1x4xf32>
    %c8_i32_22 = arith.constant 8 : i32
    %64 = arith.muli %5, %c8_i32_22 : i32
    %c1_i32_23 = arith.constant 1 : i32
    %65 = arith.addi %64, %c1_i32_23 : i32
    %c8_i32_24 = arith.constant 8 : i32
    %66 = arith.muli %65, %c8_i32_24 : i32
    %67 = arith.addi %3, %66 : i32
    %68 = arith.index_cast %67 : i32 to index
    %69 = memref.load %arg2[%68] : memref<128xi32, #tpu.memory_space<smem>>
    %c0_25 = arith.constant 0 : index
    %70 = arith.index_cast %69 : i32 to index
    %c0_26 = arith.constant 0 : index
    %71 = vector.load %arg3[%c0_25, %70, %c0_26] : memref<1x16x4xf32, #tpu.memory_space<vmem>>, vector<1x1x4xf32>
    %72 = vector.shape_cast %71 : vector<1x1x4xf32> to vector<1x4xf32>
    %c1_i32_27 = arith.constant 1 : i32
    %73 = arith.addi %67, %c1_i32_27 : i32
    %74 = arith.index_cast %73 : i32 to index
    %75 = memref.load %arg2[%74] : memref<128xi32, #tpu.memory_space<smem>>
    %c0_28 = arith.constant 0 : index
    %76 = arith.index_cast %75 : i32 to index
    %c0_29 = arith.constant 0 : index
    %77 = vector.load %arg3[%c0_28, %76, %c0_29] : memref<1x16x4xf32, #tpu.memory_space<vmem>>, vector<1x1x4xf32>
    %78 = vector.shape_cast %77 : vector<1x1x4xf32> to vector<1x4xf32>
    %79 = arith.maximumf %72, %78 : vector<1x4xf32>
    %c2_i32_30 = arith.constant 2 : i32
    %80 = arith.addi %67, %c2_i32_30 : i32
    %81 = arith.index_cast %80 : i32 to index
    %82 = memref.load %arg2[%81] : memref<128xi32, #tpu.memory_space<smem>>
    %c0_31 = arith.constant 0 : index
    %83 = arith.index_cast %82 : i32 to index
    %c0_32 = arith.constant 0 : index
    %84 = vector.load %arg3[%c0_31, %83, %c0_32] : memref<1x16x4xf32, #tpu.memory_space<vmem>>, vector<1x1x4xf32>
    %85 = vector.shape_cast %84 : vector<1x1x4xf32> to vector<1x4xf32>
    %86 = arith.maximumf %79, %85 : vector<1x4xf32>
    %c3_i32_33 = arith.constant 3 : i32
    %87 = arith.addi %67, %c3_i32_33 : i32
    %88 = arith.index_cast %87 : i32 to index
    %89 = memref.load %arg2[%88] : memref<128xi32, #tpu.memory_space<smem>>
    %c0_34 = arith.constant 0 : index
    %90 = arith.index_cast %89 : i32 to index
    %c0_35 = arith.constant 0 : index
    %91 = vector.load %arg3[%c0_34, %90, %c0_35] : memref<1x16x4xf32, #tpu.memory_space<vmem>>, vector<1x1x4xf32>
    %92 = vector.shape_cast %91 : vector<1x1x4xf32> to vector<1x4xf32>
    %93 = arith.maximumf %86, %92 : vector<1x4xf32>
    %c4_i32_36 = arith.constant 4 : i32
    %94 = arith.addi %67, %c4_i32_36 : i32
    %95 = arith.index_cast %94 : i32 to index
    %96 = memref.load %arg2[%95] : memref<128xi32, #tpu.memory_space<smem>>
    %c0_37 = arith.constant 0 : index
    %97 = arith.index_cast %96 : i32 to index
    %c0_38 = arith.constant 0 : index
    %98 = vector.load %arg3[%c0_37, %97, %c0_38] : memref<1x16x4xf32, #tpu.memory_space<vmem>>, vector<1x1x4xf32>
    %99 = vector.shape_cast %98 : vector<1x1x4xf32> to vector<1x4xf32>
    %100 = arith.maximumf %93, %99 : vector<1x4xf32>
    %c5_i32_39 = arith.constant 5 : i32
    %101 = arith.addi %67, %c5_i32_39 : i32
    %102 = arith.index_cast %101 : i32 to index
    %103 = memref.load %arg2[%102] : memref<128xi32, #tpu.memory_space<smem>>
    %c0_40 = arith.constant 0 : index
    %104 = arith.index_cast %103 : i32 to index
    %c0_41 = arith.constant 0 : index
    %105 = vector.load %arg3[%c0_40, %104, %c0_41] : memref<1x16x4xf32, #tpu.memory_space<vmem>>, vector<1x1x4xf32>
    %106 = vector.shape_cast %105 : vector<1x1x4xf32> to vector<1x4xf32>
    %107 = arith.maximumf %100, %106 : vector<1x4xf32>
    %c6_i32_42 = arith.constant 6 : i32
    %108 = arith.addi %67, %c6_i32_42 : i32
    %109 = arith.index_cast %108 : i32 to index
    %110 = memref.load %arg2[%109] : memref<128xi32, #tpu.memory_space<smem>>
    %c0_43 = arith.constant 0 : index
    %111 = arith.index_cast %110 : i32 to index
    %c0_44 = arith.constant 0 : index
    %112 = vector.load %arg3[%c0_43, %111, %c0_44] : memref<1x16x4xf32, #tpu.memory_space<vmem>>, vector<1x1x4xf32>
    %113 = vector.shape_cast %112 : vector<1x1x4xf32> to vector<1x4xf32>
    %114 = arith.maximumf %107, %113 : vector<1x4xf32>
    %c7_i32_45 = arith.constant 7 : i32
    %115 = arith.addi %67, %c7_i32_45 : i32
    %116 = arith.index_cast %115 : i32 to index
    %117 = memref.load %arg2[%116] : memref<128xi32, #tpu.memory_space<smem>>
    %c0_46 = arith.constant 0 : index
    %118 = arith.index_cast %117 : i32 to index
    %c0_47 = arith.constant 0 : index
    %119 = vector.load %arg3[%c0_46, %118, %c0_47] : memref<1x16x4xf32, #tpu.memory_space<vmem>>, vector<1x1x4xf32>
    %120 = vector.shape_cast %119 : vector<1x1x4xf32> to vector<1x4xf32>
    %121 = arith.maximumf %114, %120 : vector<1x4xf32>
    %c8_i32_48 = arith.constant 8 : i32
    %122 = arith.muli %5, %c8_i32_48 : i32
    %c2_i32_49 = arith.constant 2 : i32
    %123 = arith.addi %122, %c2_i32_49 : i32
    %c8_i32_50 = arith.constant 8 : i32
    %124 = arith.muli %123, %c8_i32_50 : i32
    %125 = arith.addi %3, %124 : i32
    %126 = arith.index_cast %125 : i32 to index
    %127 = memref.load %arg2[%126] : memref<128xi32, #tpu.memory_space<smem>>
    %c0_51 = arith.constant 0 : index
    %128 = arith.index_cast %127 : i32 to index
    %c0_52 = arith.constant 0 : index
    %129 = vector.load %arg3[%c0_51, %128, %c0_52] : memref<1x16x4xf32, #tpu.memory_space<vmem>>, vector<1x1x4xf32>
    %130 = vector.shape_cast %129 : vector<1x1x4xf32> to vector<1x4xf32>
    %c1_i32_53 = arith.constant 1 : i32
    %131 = arith.addi %125, %c1_i32_53 : i32
    %132 = arith.index_cast %131 : i32 to index
    %133 = memref.load %arg2[%132] : memref<128xi32, #tpu.memory_space<smem>>
    %c0_54 = arith.constant 0 : index
    %134 = arith.index_cast %133 : i32 to index
    %c0_55 = arith.constant 0 : index
    %135 = vector.load %arg3[%c0_54, %134, %c0_55] : memref<1x16x4xf32, #tpu.memory_space<vmem>>, vector<1x1x4xf32>
    %136 = vector.shape_cast %135 : vector<1x1x4xf32> to vector<1x4xf32>
    %137 = arith.maximumf %130, %136 : vector<1x4xf32>
    %c2_i32_56 = arith.constant 2 : i32
    %138 = arith.addi %125, %c2_i32_56 : i32
    %139 = arith.index_cast %138 : i32 to index
    %140 = memref.load %arg2[%139] : memref<128xi32, #tpu.memory_space<smem>>
    %c0_57 = arith.constant 0 : index
    %141 = arith.index_cast %140 : i32 to index
    %c0_58 = arith.constant 0 : index
    %142 = vector.load %arg3[%c0_57, %141, %c0_58] : memref<1x16x4xf32, #tpu.memory_space<vmem>>, vector<1x1x4xf32>
    %143 = vector.shape_cast %142 : vector<1x1x4xf32> to vector<1x4xf32>
    %144 = arith.maximumf %137, %143 : vector<1x4xf32>
    %c3_i32_59 = arith.constant 3 : i32
    %145 = arith.addi %125, %c3_i32_59 : i32
    %146 = arith.index_cast %145 : i32 to index
    %147 = memref.load %arg2[%146] : memref<128xi32, #tpu.memory_space<smem>>
    %c0_60 = arith.constant 0 : index
    %148 = arith.index_cast %147 : i32 to index
    %c0_61 = arith.constant 0 : index
    %149 = vector.load %arg3[%c0_60, %148, %c0_61] : memref<1x16x4xf32, #tpu.memory_space<vmem>>, vector<1x1x4xf32>
    %150 = vector.shape_cast %149 : vector<1x1x4xf32> to vector<1x4xf32>
    %151 = arith.maximumf %144, %150 : vector<1x4xf32>
    %c4_i32_62 = arith.constant 4 : i32
    %152 = arith.addi %125, %c4_i32_62 : i32
    %153 = arith.index_cast %152 : i32 to index
    %154 = memref.load %arg2[%153] : memref<128xi32, #tpu.memory_space<smem>>
    %c0_63 = arith.constant 0 : index
    %155 = arith.index_cast %154 : i32 to index
    %c0_64 = arith.constant 0 : index
    %156 = vector.load %arg3[%c0_63, %155, %c0_64] : memref<1x16x4xf32, #tpu.memory_space<vmem>>, vector<1x1x4xf32>
    %157 = vector.shape_cast %156 : vector<1x1x4xf32> to vector<1x4xf32>
    %158 = arith.maximumf %151, %157 : vector<1x4xf32>
    %c5_i32_65 = arith.constant 5 : i32
    %159 = arith.addi %125, %c5_i32_65 : i32
    %160 = arith.index_cast %159 : i32 to index
    %161 = memref.load %arg2[%160] : memref<128xi32, #tpu.memory_space<smem>>
    %c0_66 = arith.constant 0 : index
    %162 = arith.index_cast %161 : i32 to index
    %c0_67 = arith.constant 0 : index
    %163 = vector.load %arg3[%c0_66, %162, %c0_67] : memref<1x16x4xf32, #tpu.memory_space<vmem>>, vector<1x1x4xf32>
    %164 = vector.shape_cast %163 : vector<1x1x4xf32> to vector<1x4xf32>
    %165 = arith.maximumf %158, %164 : vector<1x4xf32>
    %c6_i32_68 = arith.constant 6 : i32
    %166 = arith.addi %125, %c6_i32_68 : i32
    %167 = arith.index_cast %166 : i32 to index
    %168 = memref.load %arg2[%167] : memref<128xi32, #tpu.memory_space<smem>>
    %c0_69 = arith.constant 0 : index
    %169 = arith.index_cast %168 : i32 to index
    %c0_70 = arith.constant 0 : index
    %170 = vector.load %arg3[%c0_69, %169, %c0_70] : memref<1x16x4xf32, #tpu.memory_space<vmem>>, vector<1x1x4xf32>
    %171 = vector.shape_cast %170 : vector<1x1x4xf32> to vector<1x4xf32>
    %172 = arith.maximumf %165, %171 : vector<1x4xf32>
    %c7_i32_71 = arith.constant 7 : i32
    %173 = arith.addi %125, %c7_i32_71 : i32
    %174 = arith.index_cast %173 : i32 to index
    %175 = memref.load %arg2[%174] : memref<128xi32, #tpu.memory_space<smem>>
    %c0_72 = arith.constant 0 : index
    %176 = arith.index_cast %175 : i32 to index
    %c0_73 = arith.constant 0 : index
    %177 = vector.load %arg3[%c0_72, %176, %c0_73] : memref<1x16x4xf32, #tpu.memory_space<vmem>>, vector<1x1x4xf32>
    %178 = vector.shape_cast %177 : vector<1x1x4xf32> to vector<1x4xf32>
    %179 = arith.maximumf %172, %178 : vector<1x4xf32>
    %c8_i32_74 = arith.constant 8 : i32
    %180 = arith.muli %5, %c8_i32_74 : i32
    %c3_i32_75 = arith.constant 3 : i32
    %181 = arith.addi %180, %c3_i32_75 : i32
    %c8_i32_76 = arith.constant 8 : i32
    %182 = arith.muli %181, %c8_i32_76 : i32
    %183 = arith.addi %3, %182 : i32
    %184 = arith.index_cast %183 : i32 to index
    %185 = memref.load %arg2[%184] : memref<128xi32, #tpu.memory_space<smem>>
    %c0_77 = arith.constant 0 : index
    %186 = arith.index_cast %185 : i32 to index
    %c0_78 = arith.constant 0 : index
    %187 = vector.load %arg3[%c0_77, %186, %c0_78] : memref<1x16x4xf32, #tpu.memory_space<vmem>>, vector<1x1x4xf32>
    %188 = vector.shape_cast %187 : vector<1x1x4xf32> to vector<1x4xf32>
    %c1_i32_79 = arith.constant 1 : i32
    %189 = arith.addi %183, %c1_i32_79 : i32
    %190 = arith.index_cast %189 : i32 to index
    %191 = memref.load %arg2[%190] : memref<128xi32, #tpu.memory_space<smem>>
    %c0_80 = arith.constant 0 : index
    %192 = arith.index_cast %191 : i32 to index
    %c0_81 = arith.constant 0 : index
    %193 = vector.load %arg3[%c0_80, %192, %c0_81] : memref<1x16x4xf32, #tpu.memory_space<vmem>>, vector<1x1x4xf32>
    %194 = vector.shape_cast %193 : vector<1x1x4xf32> to vector<1x4xf32>
    %195 = arith.maximumf %188, %194 : vector<1x4xf32>
    %c2_i32_82 = arith.constant 2 : i32
    %196 = arith.addi %183, %c2_i32_82 : i32
    %197 = arith.index_cast %196 : i32 to index
    %198 = memref.load %arg2[%197] : memref<128xi32, #tpu.memory_space<smem>>
    %c0_83 = arith.constant 0 : index
    %199 = arith.index_cast %198 : i32 to index
    %c0_84 = arith.constant 0 : index
    %200 = vector.load %arg3[%c0_83, %199, %c0_84] : memref<1x16x4xf32, #tpu.memory_space<vmem>>, vector<1x1x4xf32>
    %201 = vector.shape_cast %200 : vector<1x1x4xf32> to vector<1x4xf32>
    %202 = arith.maximumf %195, %201 : vector<1x4xf32>
    %c3_i32_85 = arith.constant 3 : i32
    %203 = arith.addi %183, %c3_i32_85 : i32
    %204 = arith.index_cast %203 : i32 to index
    %205 = memref.load %arg2[%204] : memref<128xi32, #tpu.memory_space<smem>>
    %c0_86 = arith.constant 0 : index
    %206 = arith.index_cast %205 : i32 to index
    %c0_87 = arith.constant 0 : index
    %207 = vector.load %arg3[%c0_86, %206, %c0_87] : memref<1x16x4xf32, #tpu.memory_space<vmem>>, vector<1x1x4xf32>
    %208 = vector.shape_cast %207 : vector<1x1x4xf32> to vector<1x4xf32>
    %209 = arith.maximumf %202, %208 : vector<1x4xf32>
    %c4_i32_88 = arith.constant 4 : i32
    %210 = arith.addi %183, %c4_i32_88 : i32
    %211 = arith.index_cast %210 : i32 to index
    %212 = memref.load %arg2[%211] : memref<128xi32, #tpu.memory_space<smem>>
    %c0_89 = arith.constant 0 : index
    %213 = arith.index_cast %212 : i32 to index
    %c0_90 = arith.constant 0 : index
    %214 = vector.load %arg3[%c0_89, %213, %c0_90] : memref<1x16x4xf32, #tpu.memory_space<vmem>>, vector<1x1x4xf32>
    %215 = vector.shape_cast %214 : vector<1x1x4xf32> to vector<1x4xf32>
    %216 = arith.maximumf %209, %215 : vector<1x4xf32>
    %c5_i32_91 = arith.constant 5 : i32
    %217 = arith.addi %183, %c5_i32_91 : i32
    %218 = arith.index_cast %217 : i32 to index
    %219 = memref.load %arg2[%218] : memref<128xi32, #tpu.memory_space<smem>>
    %c0_92 = arith.constant 0 : index
    %220 = arith.index_cast %219 : i32 to index
    %c0_93 = arith.constant 0 : index
    %221 = vector.load %arg3[%c0_92, %220, %c0_93] : memref<1x16x4xf32, #tpu.memory_space<vmem>>, vector<1x1x4xf32>
    %222 = vector.shape_cast %221 : vector<1x1x4xf32> to vector<1x4xf32>
    %223 = arith.maximumf %216, %222 : vector<1x4xf32>
    %c6_i32_94 = arith.constant 6 : i32
    %224 = arith.addi %183, %c6_i32_94 : i32
    %225 = arith.index_cast %224 : i32 to index
    %226 = memref.load %arg2[%225] : memref<128xi32, #tpu.memory_space<smem>>
    %c0_95 = arith.constant 0 : index
    %227 = arith.index_cast %226 : i32 to index
    %c0_96 = arith.constant 0 : index
    %228 = vector.load %arg3[%c0_95, %227, %c0_96] : memref<1x16x4xf32, #tpu.memory_space<vmem>>, vector<1x1x4xf32>
    %229 = vector.shape_cast %228 : vector<1x1x4xf32> to vector<1x4xf32>
    %230 = arith.maximumf %223, %229 : vector<1x4xf32>
    %c7_i32_97 = arith.constant 7 : i32
    %231 = arith.addi %183, %c7_i32_97 : i32
    %232 = arith.index_cast %231 : i32 to index
    %233 = memref.load %arg2[%232] : memref<128xi32, #tpu.memory_space<smem>>
    %c0_98 = arith.constant 0 : index
    %234 = arith.index_cast %233 : i32 to index
    %c0_99 = arith.constant 0 : index
    %235 = vector.load %arg3[%c0_98, %234, %c0_99] : memref<1x16x4xf32, #tpu.memory_space<vmem>>, vector<1x1x4xf32>
    %236 = vector.shape_cast %235 : vector<1x1x4xf32> to vector<1x4xf32>
    %237 = arith.maximumf %230, %236 : vector<1x4xf32>
    %c8_i32_100 = arith.constant 8 : i32
    %238 = arith.muli %5, %c8_i32_100 : i32
    %c4_i32_101 = arith.constant 4 : i32
    %239 = arith.addi %238, %c4_i32_101 : i32
    %c8_i32_102 = arith.constant 8 : i32
    %240 = arith.muli %239, %c8_i32_102 : i32
    %241 = arith.addi %3, %240 : i32
    %242 = arith.index_cast %241 : i32 to index
    %243 = memref.load %arg2[%242] : memref<128xi32, #tpu.memory_space<smem>>
    %c0_103 = arith.constant 0 : index
    %244 = arith.index_cast %243 : i32 to index
    %c0_104 = arith.constant 0 : index
    %245 = vector.load %arg3[%c0_103, %244, %c0_104] : memref<1x16x4xf32, #tpu.memory_space<vmem>>, vector<1x1x4xf32>
    %246 = vector.shape_cast %245 : vector<1x1x4xf32> to vector<1x4xf32>
    %c1_i32_105 = arith.constant 1 : i32
    %247 = arith.addi %241, %c1_i32_105 : i32
    %248 = arith.index_cast %247 : i32 to index
    %249 = memref.load %arg2[%248] : memref<128xi32, #tpu.memory_space<smem>>
    %c0_106 = arith.constant 0 : index
    %250 = arith.index_cast %249 : i32 to index
    %c0_107 = arith.constant 0 : index
    %251 = vector.load %arg3[%c0_106, %250, %c0_107] : memref<1x16x4xf32, #tpu.memory_space<vmem>>, vector<1x1x4xf32>
    %252 = vector.shape_cast %251 : vector<1x1x4xf32> to vector<1x4xf32>
    %253 = arith.maximumf %246, %252 : vector<1x4xf32>
    %c2_i32_108 = arith.constant 2 : i32
    %254 = arith.addi %241, %c2_i32_108 : i32
    %255 = arith.index_cast %254 : i32 to index
    %256 = memref.load %arg2[%255] : memref<128xi32, #tpu.memory_space<smem>>
    %c0_109 = arith.constant 0 : index
    %257 = arith.index_cast %256 : i32 to index
    %c0_110 = arith.constant 0 : index
    %258 = vector.load %arg3[%c0_109, %257, %c0_110] : memref<1x16x4xf32, #tpu.memory_space<vmem>>, vector<1x1x4xf32>
    %259 = vector.shape_cast %258 : vector<1x1x4xf32> to vector<1x4xf32>
    %260 = arith.maximumf %253, %259 : vector<1x4xf32>
    %c3_i32_111 = arith.constant 3 : i32
    %261 = arith.addi %241, %c3_i32_111 : i32
    %262 = arith.index_cast %261 : i32 to index
    %263 = memref.load %arg2[%262] : memref<128xi32, #tpu.memory_space<smem>>
    %c0_112 = arith.constant 0 : index
    %264 = arith.index_cast %263 : i32 to index
    %c0_113 = arith.constant 0 : index
    %265 = vector.load %arg3[%c0_112, %264, %c0_113] : memref<1x16x4xf32, #tpu.memory_space<vmem>>, vector<1x1x4xf32>
    %266 = vector.shape_cast %265 : vector<1x1x4xf32> to vector<1x4xf32>
    %267 = arith.maximumf %260, %266 : vector<1x4xf32>
    %c4_i32_114 = arith.constant 4 : i32
    %268 = arith.addi %241, %c4_i32_114 : i32
    %269 = arith.index_cast %268 : i32 to index
    %270 = memref.load %arg2[%269] : memref<128xi32, #tpu.memory_space<smem>>
    %c0_115 = arith.constant 0 : index
    %271 = arith.index_cast %270 : i32 to index
    %c0_116 = arith.constant 0 : index
    %272 = vector.load %arg3[%c0_115, %271, %c0_116] : memref<1x16x4xf32, #tpu.memory_space<vmem>>, vector<1x1x4xf32>
    %273 = vector.shape_cast %272 : vector<1x1x4xf32> to vector<1x4xf32>
    %274 = arith.maximumf %267, %273 : vector<1x4xf32>
    %c5_i32_117 = arith.constant 5 : i32
    %275 = arith.addi %241, %c5_i32_117 : i32
    %276 = arith.index_cast %275 : i32 to index
    %277 = memref.load %arg2[%276] : memref<128xi32, #tpu.memory_space<smem>>
    %c0_118 = arith.constant 0 : index
    %278 = arith.index_cast %277 : i32 to index
    %c0_119 = arith.constant 0 : index
    %279 = vector.load %arg3[%c0_118, %278, %c0_119] : memref<1x16x4xf32, #tpu.memory_space<vmem>>, vector<1x1x4xf32>
    %280 = vector.shape_cast %279 : vector<1x1x4xf32> to vector<1x4xf32>
    %281 = arith.maximumf %274, %280 : vector<1x4xf32>
    %c6_i32_120 = arith.constant 6 : i32
    %282 = arith.addi %241, %c6_i32_120 : i32
    %283 = arith.index_cast %282 : i32 to index
    %284 = memref.load %arg2[%283] : memref<128xi32, #tpu.memory_space<smem>>
    %c0_121 = arith.constant 0 : index
    %285 = arith.index_cast %284 : i32 to index
    %c0_122 = arith.constant 0 : index
    %286 = vector.load %arg3[%c0_121, %285, %c0_122] : memref<1x16x4xf32, #tpu.memory_space<vmem>>, vector<1x1x4xf32>
    %287 = vector.shape_cast %286 : vector<1x1x4xf32> to vector<1x4xf32>
    %288 = arith.maximumf %281, %287 : vector<1x4xf32>
    %c7_i32_123 = arith.constant 7 : i32
    %289 = arith.addi %241, %c7_i32_123 : i32
    %290 = arith.index_cast %289 : i32 to index
    %291 = memref.load %arg2[%290] : memref<128xi32, #tpu.memory_space<smem>>
    %c0_124 = arith.constant 0 : index
    %292 = arith.index_cast %291 : i32 to index
    %c0_125 = arith.constant 0 : index
    %293 = vector.load %arg3[%c0_124, %292, %c0_125] : memref<1x16x4xf32, #tpu.memory_space<vmem>>, vector<1x1x4xf32>
    %294 = vector.shape_cast %293 : vector<1x1x4xf32> to vector<1x4xf32>
    %295 = arith.maximumf %288, %294 : vector<1x4xf32>
    %c8_i32_126 = arith.constant 8 : i32
    %296 = arith.muli %5, %c8_i32_126 : i32
    %c5_i32_127 = arith.constant 5 : i32
    %297 = arith.addi %296, %c5_i32_127 : i32
    %c8_i32_128 = arith.constant 8 : i32
    %298 = arith.muli %297, %c8_i32_128 : i32
    %299 = arith.addi %3, %298 : i32
    %300 = arith.index_cast %299 : i32 to index
    %301 = memref.load %arg2[%300] : memref<128xi32, #tpu.memory_space<smem>>
    %c0_129 = arith.constant 0 : index
    %302 = arith.index_cast %301 : i32 to index
    %c0_130 = arith.constant 0 : index
    %303 = vector.load %arg3[%c0_129, %302, %c0_130] : memref<1x16x4xf32, #tpu.memory_space<vmem>>, vector<1x1x4xf32>
    %304 = vector.shape_cast %303 : vector<1x1x4xf32> to vector<1x4xf32>
    %c1_i32_131 = arith.constant 1 : i32
    %305 = arith.addi %299, %c1_i32_131 : i32
    %306 = arith.index_cast %305 : i32 to index
    %307 = memref.load %arg2[%306] : memref<128xi32, #tpu.memory_space<smem>>
    %c0_132 = arith.constant 0 : index
    %308 = arith.index_cast %307 : i32 to index
    %c0_133 = arith.constant 0 : index
    %309 = vector.load %arg3[%c0_132, %308, %c0_133] : memref<1x16x4xf32, #tpu.memory_space<vmem>>, vector<1x1x4xf32>
    %310 = vector.shape_cast %309 : vector<1x1x4xf32> to vector<1x4xf32>
    %311 = arith.maximumf %304, %310 : vector<1x4xf32>
    %c2_i32_134 = arith.constant 2 : i32
    %312 = arith.addi %299, %c2_i32_134 : i32
    %313 = arith.index_cast %312 : i32 to index
    %314 = memref.load %arg2[%313] : memref<128xi32, #tpu.memory_space<smem>>
    %c0_135 = arith.constant 0 : index
    %315 = arith.index_cast %314 : i32 to index
    %c0_136 = arith.constant 0 : index
    %316 = vector.load %arg3[%c0_135, %315, %c0_136] : memref<1x16x4xf32, #tpu.memory_space<vmem>>, vector<1x1x4xf32>
    %317 = vector.shape_cast %316 : vector<1x1x4xf32> to vector<1x4xf32>
    %318 = arith.maximumf %311, %317 : vector<1x4xf32>
    %c3_i32_137 = arith.constant 3 : i32
    %319 = arith.addi %299, %c3_i32_137 : i32
    %320 = arith.index_cast %319 : i32 to index
    %321 = memref.load %arg2[%320] : memref<128xi32, #tpu.memory_space<smem>>
    %c0_138 = arith.constant 0 : index
    %322 = arith.index_cast %321 : i32 to index
    %c0_139 = arith.constant 0 : index
    %323 = vector.load %arg3[%c0_138, %322, %c0_139] : memref<1x16x4xf32, #tpu.memory_space<vmem>>, vector<1x1x4xf32>
    %324 = vector.shape_cast %323 : vector<1x1x4xf32> to vector<1x4xf32>
    %325 = arith.maximumf %318, %324 : vector<1x4xf32>
    %c4_i32_140 = arith.constant 4 : i32
    %326 = arith.addi %299, %c4_i32_140 : i32
    %327 = arith.index_cast %326 : i32 to index
    %328 = memref.load %arg2[%327] : memref<128xi32, #tpu.memory_space<smem>>
    %c0_141 = arith.constant 0 : index
    %329 = arith.index_cast %328 : i32 to index
    %c0_142 = arith.constant 0 : index
    %330 = vector.load %arg3[%c0_141, %329, %c0_142] : memref<1x16x4xf32, #tpu.memory_space<vmem>>, vector<1x1x4xf32>
    %331 = vector.shape_cast %330 : vector<1x1x4xf32> to vector<1x4xf32>
    %332 = arith.maximumf %325, %331 : vector<1x4xf32>
    %c5_i32_143 = arith.constant 5 : i32
    %333 = arith.addi %299, %c5_i32_143 : i32
    %334 = arith.index_cast %333 : i32 to index
    %335 = memref.load %arg2[%334] : memref<128xi32, #tpu.memory_space<smem>>
    %c0_144 = arith.constant 0 : index
    %336 = arith.index_cast %335 : i32 to index
    %c0_145 = arith.constant 0 : index
    %337 = vector.load %arg3[%c0_144, %336, %c0_145] : memref<1x16x4xf32, #tpu.memory_space<vmem>>, vector<1x1x4xf32>
    %338 = vector.shape_cast %337 : vector<1x1x4xf32> to vector<1x4xf32>
    %339 = arith.maximumf %332, %338 : vector<1x4xf32>
    %c6_i32_146 = arith.constant 6 : i32
    %340 = arith.addi %299, %c6_i32_146 : i32
    %341 = arith.index_cast %340 : i32 to index
    %342 = memref.load %arg2[%341] : memref<128xi32, #tpu.memory_space<smem>>
    %c0_147 = arith.constant 0 : index
    %343 = arith.index_cast %342 : i32 to index
    %c0_148 = arith.constant 0 : index
    %344 = vector.load %arg3[%c0_147, %343, %c0_148] : memref<1x16x4xf32, #tpu.memory_space<vmem>>, vector<1x1x4xf32>
    %345 = vector.shape_cast %344 : vector<1x1x4xf32> to vector<1x4xf32>
    %346 = arith.maximumf %339, %345 : vector<1x4xf32>
    %c7_i32_149 = arith.constant 7 : i32
    %347 = arith.addi %299, %c7_i32_149 : i32
    %348 = arith.index_cast %347 : i32 to index
    %349 = memref.load %arg2[%348] : memref<128xi32, #tpu.memory_space<smem>>
    %c0_150 = arith.constant 0 : index
    %350 = arith.index_cast %349 : i32 to index
    %c0_151 = arith.constant 0 : index
    %351 = vector.load %arg3[%c0_150, %350, %c0_151] : memref<1x16x4xf32, #tpu.memory_space<vmem>>, vector<1x1x4xf32>
    %352 = vector.shape_cast %351 : vector<1x1x4xf32> to vector<1x4xf32>
    %353 = arith.maximumf %346, %352 : vector<1x4xf32>
    %c8_i32_152 = arith.constant 8 : i32
    %354 = arith.muli %5, %c8_i32_152 : i32
    %c6_i32_153 = arith.constant 6 : i32
    %355 = arith.addi %354, %c6_i32_153 : i32
    %c8_i32_154 = arith.constant 8 : i32
    %356 = arith.muli %355, %c8_i32_154 : i32
    %357 = arith.addi %3, %356 : i32
    %358 = arith.index_cast %357 : i32 to index
    %359 = memref.load %arg2[%358] : memref<128xi32, #tpu.memory_space<smem>>
    %c0_155 = arith.constant 0 : index
    %360 = arith.index_cast %359 : i32 to index
    %c0_156 = arith.constant 0 : index
    %361 = vector.load %arg3[%c0_155, %360, %c0_156] : memref<1x16x4xf32, #tpu.memory_space<vmem>>, vector<1x1x4xf32>
    %362 = vector.shape_cast %361 : vector<1x1x4xf32> to vector<1x4xf32>
    %c1_i32_157 = arith.constant 1 : i32
    %363 = arith.addi %357, %c1_i32_157 : i32
    %364 = arith.index_cast %363 : i32 to index
    %365 = memref.load %arg2[%364] : memref<128xi32, #tpu.memory_space<smem>>
    %c0_158 = arith.constant 0 : index
    %366 = arith.index_cast %365 : i32 to index
    %c0_159 = arith.constant 0 : index
    %367 = vector.load %arg3[%c0_158, %366, %c0_159] : memref<1x16x4xf32, #tpu.memory_space<vmem>>, vector<1x1x4xf32>
    %368 = vector.shape_cast %367 : vector<1x1x4xf32> to vector<1x4xf32>
    %369 = arith.maximumf %362, %368 : vector<1x4xf32>
    %c2_i32_160 = arith.constant 2 : i32
    %370 = arith.addi %357, %c2_i32_160 : i32
    %371 = arith.index_cast %370 : i32 to index
    %372 = memref.load %arg2[%371] : memref<128xi32, #tpu.memory_space<smem>>
    %c0_161 = arith.constant 0 : index
    %373 = arith.index_cast %372 : i32 to index
    %c0_162 = arith.constant 0 : index
    %374 = vector.load %arg3[%c0_161, %373, %c0_162] : memref<1x16x4xf32, #tpu.memory_space<vmem>>, vector<1x1x4xf32>
    %375 = vector.shape_cast %374 : vector<1x1x4xf32> to vector<1x4xf32>
    %376 = arith.maximumf %369, %375 : vector<1x4xf32>
    %c3_i32_163 = arith.constant 3 : i32
    %377 = arith.addi %357, %c3_i32_163 : i32
    %378 = arith.index_cast %377 : i32 to index
    %379 = memref.load %arg2[%378] : memref<128xi32, #tpu.memory_space<smem>>
    %c0_164 = arith.constant 0 : index
    %380 = arith.index_cast %379 : i32 to index
    %c0_165 = arith.constant 0 : index
    %381 = vector.load %arg3[%c0_164, %380, %c0_165] : memref<1x16x4xf32, #tpu.memory_space<vmem>>, vector<1x1x4xf32>
    %382 = vector.shape_cast %381 : vector<1x1x4xf32> to vector<1x4xf32>
    %383 = arith.maximumf %376, %382 : vector<1x4xf32>
    %c4_i32_166 = arith.constant 4 : i32
    %384 = arith.addi %357, %c4_i32_166 : i32
    %385 = arith.index_cast %384 : i32 to index
    %386 = memref.load %arg2[%385] : memref<128xi32, #tpu.memory_space<smem>>
    %c0_167 = arith.constant 0 : index
    %387 = arith.index_cast %386 : i32 to index
    %c0_168 = arith.constant 0 : index
    %388 = vector.load %arg3[%c0_167, %387, %c0_168] : memref<1x16x4xf32, #tpu.memory_space<vmem>>, vector<1x1x4xf32>
    %389 = vector.shape_cast %388 : vector<1x1x4xf32> to vector<1x4xf32>
    %390 = arith.maximumf %383, %389 : vector<1x4xf32>
    %c5_i32_169 = arith.constant 5 : i32
    %391 = arith.addi %357, %c5_i32_169 : i32
    %392 = arith.index_cast %391 : i32 to index
    %393 = memref.load %arg2[%392] : memref<128xi32, #tpu.memory_space<smem>>
    %c0_170 = arith.constant 0 : index
    %394 = arith.index_cast %393 : i32 to index
    %c0_171 = arith.constant 0 : index
    %395 = vector.load %arg3[%c0_170, %394, %c0_171] : memref<1x16x4xf32, #tpu.memory_space<vmem>>, vector<1x1x4xf32>
    %396 = vector.shape_cast %395 : vector<1x1x4xf32> to vector<1x4xf32>
    %397 = arith.maximumf %390, %396 : vector<1x4xf32>
    %c6_i32_172 = arith.constant 6 : i32
    %398 = arith.addi %357, %c6_i32_172 : i32
    %399 = arith.index_cast %398 : i32 to index
    %400 = memref.load %arg2[%399] : memref<128xi32, #tpu.memory_space<smem>>
    %c0_173 = arith.constant 0 : index
    %401 = arith.index_cast %400 : i32 to index
    %c0_174 = arith.constant 0 : index
    %402 = vector.load %arg3[%c0_173, %401, %c0_174] : memref<1x16x4xf32, #tpu.memory_space<vmem>>, vector<1x1x4xf32>
    %403 = vector.shape_cast %402 : vector<1x1x4xf32> to vector<1x4xf32>
    %404 = arith.maximumf %397, %403 : vector<1x4xf32>
    %c7_i32_175 = arith.constant 7 : i32
    %405 = arith.addi %357, %c7_i32_175 : i32
    %406 = arith.index_cast %405 : i32 to index
    %407 = memref.load %arg2[%406] : memref<128xi32, #tpu.memory_space<smem>>
    %c0_176 = arith.constant 0 : index
    %408 = arith.index_cast %407 : i32 to index
    %c0_177 = arith.constant 0 : index
    %409 = vector.load %arg3[%c0_176, %408, %c0_177] : memref<1x16x4xf32, #tpu.memory_space<vmem>>, vector<1x1x4xf32>
    %410 = vector.shape_cast %409 : vector<1x1x4xf32> to vector<1x4xf32>
    %411 = arith.maximumf %404, %410 : vector<1x4xf32>
    %c8_i32_178 = arith.constant 8 : i32
    %412 = arith.muli %5, %c8_i32_178 : i32
    %c7_i32_179 = arith.constant 7 : i32
    %413 = arith.addi %412, %c7_i32_179 : i32
    %c8_i32_180 = arith.constant 8 : i32
    %414 = arith.muli %413, %c8_i32_180 : i32
    %415 = arith.addi %3, %414 : i32
    %416 = arith.index_cast %415 : i32 to index
    %417 = memref.load %arg2[%416] : memref<128xi32, #tpu.memory_space<smem>>
    %c0_181 = arith.constant 0 : index
    %418 = arith.index_cast %417 : i32 to index
    %c0_182 = arith.constant 0 : index
    %419 = vector.load %arg3[%c0_181, %418, %c0_182] : memref<1x16x4xf32, #tpu.memory_space<vmem>>, vector<1x1x4xf32>
    %420 = vector.shape_cast %419 : vector<1x1x4xf32> to vector<1x4xf32>
    %c1_i32_183 = arith.constant 1 : i32
    %421 = arith.addi %415, %c1_i32_183 : i32
    %422 = arith.index_cast %421 : i32 to index
    %423 = memref.load %arg2[%422] : memref<128xi32, #tpu.memory_space<smem>>
    %c0_184 = arith.constant 0 : index
    %424 = arith.index_cast %423 : i32 to index
    %c0_185 = arith.constant 0 : index
    %425 = vector.load %arg3[%c0_184, %424, %c0_185] : memref<1x16x4xf32, #tpu.memory_space<vmem>>, vector<1x1x4xf32>
    %426 = vector.shape_cast %425 : vector<1x1x4xf32> to vector<1x4xf32>
    %427 = arith.maximumf %420, %426 : vector<1x4xf32>
    %c2_i32_186 = arith.constant 2 : i32
    %428 = arith.addi %415, %c2_i32_186 : i32
    %429 = arith.index_cast %428 : i32 to index
    %430 = memref.load %arg2[%429] : memref<128xi32, #tpu.memory_space<smem>>
    %c0_187 = arith.constant 0 : index
    %431 = arith.index_cast %430 : i32 to index
    %c0_188 = arith.constant 0 : index
    %432 = vector.load %arg3[%c0_187, %431, %c0_188] : memref<1x16x4xf32, #tpu.memory_space<vmem>>, vector<1x1x4xf32>
    %433 = vector.shape_cast %432 : vector<1x1x4xf32> to vector<1x4xf32>
    %434 = arith.maximumf %427, %433 : vector<1x4xf32>
    %c3_i32_189 = arith.constant 3 : i32
    %435 = arith.addi %415, %c3_i32_189 : i32
    %436 = arith.index_cast %435 : i32 to index
    %437 = memref.load %arg2[%436] : memref<128xi32, #tpu.memory_space<smem>>
    %c0_190 = arith.constant 0 : index
    %438 = arith.index_cast %437 : i32 to index
    %c0_191 = arith.constant 0 : index
    %439 = vector.load %arg3[%c0_190, %438, %c0_191] : memref<1x16x4xf32, #tpu.memory_space<vmem>>, vector<1x1x4xf32>
    %440 = vector.shape_cast %439 : vector<1x1x4xf32> to vector<1x4xf32>
    %441 = arith.maximumf %434, %440 : vector<1x4xf32>
    %c4_i32_192 = arith.constant 4 : i32
    %442 = arith.addi %415, %c4_i32_192 : i32
    %443 = arith.index_cast %442 : i32 to index
    %444 = memref.load %arg2[%443] : memref<128xi32, #tpu.memory_space<smem>>
    %c0_193 = arith.constant 0 : index
    %445 = arith.index_cast %444 : i32 to index
    %c0_194 = arith.constant 0 : index
    %446 = vector.load %arg3[%c0_193, %445, %c0_194] : memref<1x16x4xf32, #tpu.memory_space<vmem>>, vector<1x1x4xf32>
    %447 = vector.shape_cast %446 : vector<1x1x4xf32> to vector<1x4xf32>
    %448 = arith.maximumf %441, %447 : vector<1x4xf32>
    %c5_i32_195 = arith.constant 5 : i32
    %449 = arith.addi %415, %c5_i32_195 : i32
    %450 = arith.index_cast %449 : i32 to index
    %451 = memref.load %arg2[%450] : memref<128xi32, #tpu.memory_space<smem>>
    %c0_196 = arith.constant 0 : index
    %452 = arith.index_cast %451 : i32 to index
    %c0_197 = arith.constant 0 : index
    %453 = vector.load %arg3[%c0_196, %452, %c0_197] : memref<1x16x4xf32, #tpu.memory_space<vmem>>, vector<1x1x4xf32>
    %454 = vector.shape_cast %453 : vector<1x1x4xf32> to vector<1x4xf32>
    %455 = arith.maximumf %448, %454 : vector<1x4xf32>
    %c6_i32_198 = arith.constant 6 : i32
    %456 = arith.addi %415, %c6_i32_198 : i32
    %457 = arith.index_cast %456 : i32 to index
    %458 = memref.load %arg2[%457] : memref<128xi32, #tpu.memory_space<smem>>
    %c0_199 = arith.constant 0 : index
    %459 = arith.index_cast %458 : i32 to index
    %c0_200 = arith.constant 0 : index
    %460 = vector.load %arg3[%c0_199, %459, %c0_200] : memref<1x16x4xf32, #tpu.memory_space<vmem>>, vector<1x1x4xf32>
    %461 = vector.shape_cast %460 : vector<1x1x4xf32> to vector<1x4xf32>
    %462 = arith.maximumf %455, %461 : vector<1x4xf32>
    %c7_i32_201 = arith.constant 7 : i32
    %463 = arith.addi %415, %c7_i32_201 : i32
    %464 = arith.index_cast %463 : i32 to index
    %465 = memref.load %arg2[%464] : memref<128xi32, #tpu.memory_space<smem>>
    %c0_202 = arith.constant 0 : index
    %466 = arith.index_cast %465 : i32 to index
    %c0_203 = arith.constant 0 : index
    %467 = vector.load %arg3[%c0_202, %466, %c0_203] : memref<1x16x4xf32, #tpu.memory_space<vmem>>, vector<1x1x4xf32>
    %468 = vector.shape_cast %467 : vector<1x1x4xf32> to vector<1x4xf32>
    %469 = arith.maximumf %462, %468 : vector<1x4xf32>
    %470 = tpu.concatenate %63, %121, %179, %237, %295, %353, %411, %469 in 0 : vector<1x4xf32>, vector<1x4xf32>, vector<1x4xf32>, vector<1x4xf32>, vector<1x4xf32>, vector<1x4xf32>, vector<1x4xf32>, vector<1x4xf32> -> vector<8x4xf32>
    %c8_i32_204 = arith.constant 8 : i32
    %471 = arith.muli %5, %c8_i32_204 : i32
    %472 = tpu.assume_multiple %471, 8 : i32
    %c0_205 = arith.constant 0 : index
    %473 = arith.index_cast %472 : i32 to index
    %c0_206 = arith.constant 0 : index
    %474 = vector.load %arg4[%c0_205, %473, %c0_206] : memref<1x8x4xf32, #tpu.memory_space<vmem>>, vector<1x8x4xf32>
    %475 = vector.shape_cast %474 : vector<1x8x4xf32> to vector<8x4xf32>
    %476 = vector.shape_cast %470 : vector<8x4xf32> to vector<1x8x4xf32>
    tpu.vector_store %arg4[%c0_205, %473, %c0_206], %476 {strides = array<i32>} : memref<1x8x4xf32, #tpu.memory_space<vmem>>, vector<1x8x4xf32>,
    %c1_i32_207 = arith.constant 1 : i32
    return
  }
  func.func @transform_0(%arg0: i32, %arg1: i32, %arg2: memref<128xi32, #tpu.memory_space<smem>>) -> (i32, i32, i32) {
    %c0_i32 = arith.constant 0 : i32
    %c0_i32_0 = arith.constant 0 : i32
    %c0_i32_1 = arith.constant 0 : i32
    return %arg0, %c0_i32, %c0_i32_0 : i32, i32, i32
  }
  func.func @transform_1(%arg0: i32, %arg1: i32, %arg2: memref<128xi32, #tpu.memory_space<smem>>) -> (i32, i32, i32) {
    %c0_i32 = arith.constant 0 : i32
    %c0_i32_0 = arith.constant 0 : i32
    return %arg0, %arg1, %c0_i32 : i32, i32, i32
  }
}

</mosaic_0001>

<llo_original>
// kernel: custom-call.6
$region0: #{custom-call.6}
  %s0 = inlined_call_operand.vmem [shape: f32[2,16], index: 0, kind: output, shape index: {}]

// kernel: masked_max_pool.1
$region0: #{masked_max_pool.1}
  #allocation0 [shape = 'u32[]', space=smem, size = 0x4, offset = 0x4, fixed_abs, tag = 'smem constant byte address 0x4 - core index']
  #allocation1 [shape = 'u32[144,128]{1,0:T(1,128)}', space=vmem, size = 0x12000, scoped, tag = 'internal scratch']
  #allocation2 [shape = 's32[1]{0}', space=sflag, size = 0x4, scoped, tag = 'scoped memory for masked_max_pool.1']
  #allocation3 [shape = 'u8[512]{0}', space=smem, size = 0x200, scoped, tag = 'prefetched SMEM operand 0']
  %s0 = inlined_call_operand.vmem [shape: s32[128], index: 0, kind: input, shape index: {}]
  %s1 = inlined_call_operand.vmem [shape: f32[2,16,4], index: 1, kind: input, shape index: {}]
  %s2 = inlined_call_operand.vmem [shape: f32[2,8,4], index: 2, kind: output, shape index: {}]
  %s3 = sld [smem:[#allocation0]]
  $region37: #{masked_max_pool.1} parent=0
    _
  %s5 = ssub.s32 1, %s3
  %s6 = scalar_select 0, %s5, %s3
  %s7 = sshll.u32 %s0, 4
  %s8 = int_to_ptr.vmem [resolvable:$true] %s7
  %10 = dma.vmem_to_smem %s8, 16, [#allocation3], [#allocation2]
  %11 = dma.done [#allocation2], 16
  %12 = sfence
  loop: start=0, step=1, limit=4
  $region2: #{masked_max_pool.1} parent=0 // loop_pre_header
    _
  $region3: #{masked_max_pool.1} parent=0 // loop_header
    %s14 = sphi 0, %s18
    %p15 = scmp.ge.s32.totalorder %s14, 4
    %s21 = sphi 0, %s33
    %s22 = sphi 0, %s29
    %s23 = sphi 0, %s21
    %s24 = sphi 0, %s22
    %s25 = sphi 0, %s23
    %s26 = sphi 0, %s24
    %s36 = sphi 0, %s38
    %s39 = sphi 0, %s36
    %s40 = sphi 0, %s39
    %s56 = sphi 0, %s40
    %s64 = sphi 0, %s66
    %s67 = sphi 0, %s64
    %s68 = sphi 0, %s67
    %s84 = sphi 0, %s68
  $region4: #{masked_max_pool.1} parent=0 // loop_header_branch
    %17 = sbr.rel (%p15) target = $region8
  $region5: #{masked_max_pool.1} parent=0 // loop_body
    %s19 = ssub.s32 %s14, 1
    %s20 = ssub.s32 %s14, 2
    %s27 = sadd.s32 1, %s22
    %p28 = scmp.ge.s32.totalorder %s27, 1
    %s29 = scalar_select %p28, 0, %s27
    %s30 = sadd.s32 1, %s21
    %s31 = scalar_select %p28, %s30, %s21
    %p32 = scmp.ge.s32.totalorder %s31, 2
    %s33 = scalar_select %p32, 0, %s31
    %s34 = ssub.s32 %s21, %s33
    %p35 = scmp.eq.s32.totalorder %s34, 0
    %s37 = sadd.s32 %s36, 1
    %s38 = scalar_select %p35, %s36, %s37
    %p41 = pneg %p35
    %p42 = scmp.eq.s32.totalorder %s14, 1
    %p43 = por %p41, %p42
    %p44 = scmp.ne.s32.totalorder %s36, %s39
    %p45 = scmp.eq.s32.totalorder %s14, 0
    %p46 = por %p44, %p45
    %p47 = scmp.ne.s32.totalorder %s36, %s39
    %p48 = scmp.eq.s32.totalorder %s19, 1
    %p49 = por %p47, %p48
    %p50 = scmp.ne.s32.totalorder %s39, %s40
    %p51 = scmp.eq.s32.totalorder %s19, 0
    %p52 = por %p50, %p51
    %p53 = scmp.ne.s32.totalorder %s39, %s40
    %p54 = scmp.eq.s32.totalorder %s20, 1
    %p55 = por %p53, %p54
    %p57 = scmp.ne.s32.totalorder %s40, %s56
    %p58 = scmp.eq.s32.totalorder %s20, 0
    %p59 = por %p57, %p58
    %s60 = ssub.s32 %s21, %s33
    %s61 = ssub.s32 %s22, %s29
    %s62 = sor.u32 %s60, %s61
    %p63 = scmp.eq.s32.totalorder %s62, 0
    %s65 = sadd.s32 %s64, 1
    %s66 = scalar_select %p63, %s64, %s65
    %p69 = pneg %p63
    %p70 = scmp.eq.s32.totalorder %s14, 1
    %p71 = por %p69, %p70
    %p72 = scmp.ne.s32.totalorder %s64, %s67
    %p73 = scmp.eq.s32.totalorder %s14, 0
    %p74 = por %p72, %p73
    %p75 = scmp.ne.s32.totalorder %s64, %s67
    %p76 = scmp.eq.s32.totalorder %s19, 1
    %p77 = por %p75, %p76
    %p78 = scmp.ne.s32.totalorder %s67, %s68
    %p79 = scmp.eq.s32.totalorder %s19, 0
    %p80 = por %p78, %p79
    %p81 = scmp.ne.s32.totalorder %s67, %s68
    %p82 = scmp.eq.s32.totalorder %s20, 1
    %p83 = por %p81, %p82
    %p85 = scmp.ne.s32.totalorder %s68, %s84
    %p86 = scmp.eq.s32.totalorder %s20, 0
    %p87 = por %p85, %p86
    %p88 = scmp.le.s32.totalorder 1, %s14
    %p89 = scmp.lt.s32.totalorder %s14, 3
    %p90 = pnand %p88, %p89
    %p91 = pneg %p90
    // Predicated region
    $region9: #{masked_max_pool.1} parent=5 // pred_check
      _
    $region10: #{masked_max_pool.1} parent=5 // pred_check_branch
      %93 = sbr.rel (%p90) target = $region12
    $region11: #{masked_max_pool.1} parent=5 // pred_region
      %s94 = ssub.s32 %s14, 1
    $region12: #{masked_max_pool.1} parent=5 // pred_fallthru
      _
    %p95 = scmp.lt.s32.totalorder %s14, 2
    // Predicated region
    $region13: #{masked_max_pool.1} parent=5 // pred_check
      %p96 = pneg %p95
    $region14: #{masked_max_pool.1} parent=5 // pred_check_branch
      %98 = sbr.rel (%p96) target = $region16
    $region15: #{masked_max_pool.1} parent=5 // pred_region
      // Predicated region
      $region17: #{masked_max_pool.1} parent=15 // pred_check
        %p99 = pneg %p46
      $region18: #{masked_max_pool.1} parent=15 // pred_check_branch
        %101 = sbr.rel (%p99) target = $region20
      $region19: #{masked_max_pool.1} parent=15 // pred_region
        %p102 = scmp.lt.s32.totalorder %s21, 1
        %s103 = scalar_select %p102, %s21, 1
        %s104 = smul.addr %s103, 2
        %s105 = smul.addr %s104, 8
        %s106 = scalar_lea.vmem %s1, %s105
      $region20: #{masked_max_pool.1} parent=15 // pred_fallthru
        _
    $region16: #{masked_max_pool.1} parent=5 // pred_fallthru
      _
    %p107 = scmp.le.s32.totalorder 1, %s14
    %p108 = scmp.lt.s32.totalorder %s14, 3
    %p109 = pnand %p107, %p108
    %p110 = pneg %p109
    // Predicated region
    $region21: #{masked_max_pool.1} parent=5 // pred_check
      _
    $region22: #{masked_max_pool.1} parent=5 // pred_check_branch
      %112 = sbr.rel (%p109) target = $region24
    $region23: #{masked_max_pool.1} parent=5 // pred_region
      %s113 = ssub.s32 %s14, 1
      %p114 = scmp.lt.s32.totalorder %s23, 1
      %s115 = scalar_select %p114, %s23, 1
      %s116 = smul.addr %s115, 2
      %s117 = smul.addr %s116, 8
      %s118 = scalar_lea.vmem %s1, %s117
      %p119 = pneg %p52
      %p120 = pneg %p49
      %p121 = pneg %p80
      %p122 = pneg %p77
      %p123 = scmp.lt.s32.totalorder %s23, 1
      %s124 = scalar_select %p123, %s23, 1
      %p125 = scmp.lt.s32.totalorder %s24, 0
      %s126 = scalar_select %p125, %s24, 0
      %s127 = sadd.s32 %s126, %s124
      %s128 = smul.addr %s127, 8
      %s129 = scalar_lea.vmem %s2, %s128
      %p130 = scmp.lt.s32.totalorder %s23, 1
      %s131 = scalar_select %p130, %s23, 1
      %s132 = smul.addr %s131, 2
      %s133 = smul.addr %s132, 8
      %s134 = scalar_lea.vmem %s1, %s133
      %p135 = scmp.lt.s32.totalorder %s23, 1
      %s136 = scalar_select %p135, %s23, 1
      %p137 = scmp.lt.s32.totalorder %s24, 0
      %s138 = scalar_select %p137, %s24, 0
      %s139 = sadd.s32 %s138, %s136
      %s140 = smul.addr %s139, 8
      %s141 = scalar_lea.vmem %s2, %s140
      %s142 = smul.u32 %s23, 8
      %s143 = smul.u32 %s24, 8
      %s144 = sadd.s32 %s142, %s143
      %s145 = smul.u32 %s144, 8
      %s146 = sld [smem:[#allocation3 + %s145]]
      %s147 = scalar_lea.vmem %s134, %s146
      %v148 = vld [vmem:[%s147] sm:$0x1]
      %s149 = sadd.s32 %s145, 1
      %s150 = sld [smem:[#allocation3 + %s149]]
      %s151 = scalar_lea.vmem %s134, %s150
      %v152 = vld [vmem:[%s151] sm:$0x1]
      %v153 = vmax.f32 %v148, %v152
      %s154 = sadd.s32 %s145, 2
      %s155 = sld [smem:[#allocation3 + %s154]]
      %s156 = scalar_lea.vmem %s134, %s155
      %v157 = vld [vmem:[%s156] sm:$0x1]
      %v158 = vmax.f32 %v153, %v157
      %s159 = sadd.s32 %s145, 3
      %s160 = sld [smem:[#allocation3 + %s159]]
      %s161 = scalar_lea.vmem %s134, %s160
      %v162 = vld [vmem:[%s161] sm:$0x1]
      %v163 = vmax.f32 %v158, %v162
      %s164 = sadd.s32 %s145, 4
      %s165 = sld [smem:[#allocation3 + %s164]]
      %s166 = scalar_lea.vmem %s134, %s165
      %v167 = vld [vmem:[%s166] sm:$0x1]
      %v168 = vmax.f32 %v163, %v167
      %s169 = sadd.s32 %s145, 5
      %s170 = sld [smem:[#allocation3 + %s169]]
      %s171 = scalar_lea.vmem %s134, %s170
      %v172 = vld [vmem:[%s171] sm:$0x1]
      %v173 = vmax.f32 %v168, %v172
      %s174 = sadd.s32 %s145, 6
      %s175 = sld [smem:[#allocation3 + %s174]]
      %s176 = scalar_lea.vmem %s134, %s175
      %v177 = vld [vmem:[%s176] sm:$0x1]
      %v178 = vmax.f32 %v173, %v177
      %s179 = sadd.s32 %s145, 7
      %s180 = sld [smem:[#allocation3 + %s179]]
      %s181 = scalar_lea.vmem %s134, %s180
      %v182 = vld [vmem:[%s181] sm:$0x1]
      %v183 = vmax.f32 %v178, %v182
      %s184 = sadd.s32 %s145, 8
      %s185 = sld [smem:[#allocation3 + %s184]]
      %s186 = scalar_lea.vmem %s134, %s185
      %v187 = vld [vmem:[%s186] sm:$0x1]
      %s188 = sadd.s32 %s145, 9
      %s189 = sld [smem:[#allocation3 + %s188]]
      %s190 = scalar_lea.vmem %s134, %s189
      %v191 = vld [vmem:[%s190] sm:$0x1]
      %v192 = vmax.f32 %v187, %v191
      %s193 = sadd.s32 %s145, 10
      %s194 = sld [smem:[#allocation3 + %s193]]
      %s195 = scalar_lea.vmem %s134, %s194
      %v196 = vld [vmem:[%s195] sm:$0x1]
      %v197 = vmax.f32 %v192, %v196
      %s198 = sadd.s32 %s145, 11
      %s199 = sld [smem:[#allocation3 + %s198]]
      %s200 = scalar_lea.vmem %s134, %s199
      %v201 = vld [vmem:[%s200] sm:$0x1]
      %v202 = vmax.f32 %v197, %v201
      %s203 = sadd.s32 %s145, 12
      %s204 = sld [smem:[#allocation3 + %s203]]
      %s205 = scalar_lea.vmem %s134, %s204
      %v206 = vld [vmem:[%s205] sm:$0x1]
      %v207 = vmax.f32 %v202, %v206
      %s208 = sadd.s32 %s145, 13
      %s209 = sld [smem:[#allocation3 + %s208]]
      %s210 = scalar_lea.vmem %s134, %s209
      %v211 = vld [vmem:[%s210] sm:$0x1]
      %v212 = vmax.f32 %v207, %v211
      %s213 = sadd.s32 %s145, 14
      %s214 = sld [smem:[#allocation3 + %s213]]
      %s215 = scalar_lea.vmem %s134, %s214
      %v216 = vld [vmem:[%s215] sm:$0x1]
      %v217 = vmax.f32 %v212, %v216
      %s218 = sadd.s32 %s145, 15
      %s219 = sld [smem:[#allocation3 + %s218]]
      %s220 = scalar_lea.vmem %s134, %s219
      %v221 = vld [vmem:[%s220] sm:$0x1]
      %v222 = vmax.f32 %v217, %v221
      %s223 = sadd.s32 %s145, 16
      %s224 = sld [smem:[#allocation3 + %s223]]
      %s225 = scalar_lea.vmem %s134, %s224
      %v226 = vld [vmem:[%s225] sm:$0x1]
      %s227 = sadd.s32 %s145, 17
      %s228 = sld [smem:[#allocation3 + %s227]]
      %s229 = scalar_lea.vmem %s134, %s228
      %v230 = vld [vmem:[%s229] sm:$0x1]
      %v231 = vmax.f32 %v226, %v230
      %s232 = sadd.s32 %s145, 18
      %s233 = sld [smem:[#allocation3 + %s232]]
      %s234 = scalar_lea.vmem %s134, %s233
      %v235 = vld [vmem:[%s234] sm:$0x1]
      %v236 = vmax.f32 %v231, %v235
      %s237 = sadd.s32 %s145, 19
      %s238 = sld [smem:[#allocation3 + %s237]]
      %s239 = scalar_lea.vmem %s134, %s238
      %v240 = vld [vmem:[%s239] sm:$0x1]
      %v241 = vmax.f32 %v236, %v240
      %s242 = sadd.s32 %s145, 20
      %s243 = sld [smem:[#allocation3 + %s242]]
      %s244 = scalar_lea.vmem %s134, %s243
      %v245 = vld [vmem:[%s244] sm:$0x1]
      %v246 = vmax.f32 %v241, %v245
      %s247 = sadd.s32 %s145, 21
      %s248 = sld [smem:[#allocation3 + %s247]]
      %s249 = scalar_lea.vmem %s134, %s248
      %v250 = vld [vmem:[%s249] sm:$0x1]
      %v251 = vmax.f32 %v246, %v250
      %s252 = sadd.s32 %s145, 22
      %s253 = sld [smem:[#allocation3 + %s252]]
      %s254 = scalar_lea.vmem %s134, %s253
      %v255 = vld [vmem:[%s254] sm:$0x1]
      %v256 = vmax.f32 %v251, %v255
      %s257 = sadd.s32 %s145, 23
      %s258 = sld [smem:[#allocation3 + %s257]]
      %s259 = scalar_lea.vmem %s134, %s258
      %v260 = vld [vmem:[%s259] sm:$0x1]
      %v261 = vmax.f32 %v256, %v260
      %s262 = sadd.s32 %s145, 24
      %s263 = sld [smem:[#allocation3 + %s262]]
      %s264 = scalar_lea.vmem %s134, %s263
      %v265 = vld [vmem:[%s264] sm:$0x1]
      %s266 = sadd.s32 %s145, 25
      %s267 = sld [smem:[#allocation3 + %s266]]
      %s268 = scalar_lea.vmem %s134, %s267
      %v269 = vld [vmem:[%s268] sm:$0x1]
      %v270 = vmax.f32 %v265, %v269
      %s271 = sadd.s32 %s145, 26
      %s272 = sld [smem:[#allocation3 + %s271]]
      %s273 = scalar_lea.vmem %s134, %s272
      %v274 = vld [vmem:[%s273] sm:$0x1]
      %v275 = vmax.f32 %v270, %v274
      %s276 = sadd.s32 %s145, 27
      %s277 = sld [smem:[#allocation3 + %s276]]
      %s278 = scalar_lea.vmem %s134, %s277
      %v279 = vld [vmem:[%s278] sm:$0x1]
      %v280 = vmax.f32 %v275, %v279
      %s281 = sadd.s32 %s145, 28
      %s282 = sld [smem:[#allocation3 + %s281]]
      %s283 = scalar_lea.vmem %s134, %s282
      %v284 = vld [vmem:[%s283] sm:$0x1]
      %v285 = vmax.f32 %v280, %v284
      %s286 = sadd.s32 %s145, 29
      %s287 = sld [smem:[#allocation3 + %s286]]
      %s288 = scalar_lea.vmem %s134, %s287
      %v289 = vld [vmem:[%s288] sm:$0x1]
      %v290 = vmax.f32 %v285, %v289
      %s291 = sadd.s32 %s145, 30
      %s292 = sld [smem:[#allocation3 + %s291]]
      %s293 = scalar_lea.vmem %s134, %s292
      %v294 = vld [vmem:[%s293] sm:$0x1]
      %v295 = vmax.f32 %v290, %v294
      %s296 = sadd.s32 %s145, 31
      %s297 = sld [smem:[#allocation3 + %s296]]
      %s298 = scalar_lea.vmem %s134, %s297
      %v299 = vld [vmem:[%s298] sm:$0x1]
      %v300 = vmax.f32 %v295, %v299
      %s301 = sadd.s32 %s145, 32
      %s302 = sld [smem:[#allocation3 + %s301]]
      %s303 = scalar_lea.vmem %s134, %s302
      %v304 = vld [vmem:[%s303] sm:$0x1]
      %s305 = sadd.s32 %s145, 33
      %s306 = sld [smem:[#allocation3 + %s305]]
      %s307 = scalar_lea.vmem %s134, %s306
      %v308 = vld [vmem:[%s307] sm:$0x1]
      %v309 = vmax.f32 %v304, %v308
      %s310 = sadd.s32 %s145, 34
      %s311 = sld [smem:[#allocation3 + %s310]]
      %s312 = scalar_lea.vmem %s134, %s311
      %v313 = vld [vmem:[%s312] sm:$0x1]
      %v314 = vmax.f32 %v309, %v313
      %s315 = sadd.s32 %s145, 35
      %s316 = sld [smem:[#allocation3 + %s315]]
      %s317 = scalar_lea.vmem %s134, %s316
      %v318 = vld [vmem:[%s317] sm:$0x1]
      %v319 = vmax.f32 %v314, %v318
      %s320 = sadd.s32 %s145, 36
      %s321 = sld [smem:[#allocation3 + %s320]]
      %s322 = scalar_lea.vmem %s134, %s321
      %v323 = vld [vmem:[%s322] sm:$0x1]
      %v324 = vmax.f32 %v319, %v323
      %s325 = sadd.s32 %s145, 37
      %s326 = sld [smem:[#allocation3 + %s325]]
      %s327 = scalar_lea.vmem %s134, %s326
      %v328 = vld [vmem:[%s327] sm:$0x1]
      %v329 = vmax.f32 %v324, %v328
      %s330 = sadd.s32 %s145, 38
      %s331 = sld [smem:[#allocation3 + %s330]]
      %s332 = scalar_lea.vmem %s134, %s331
      %v333 = vld [vmem:[%s332] sm:$0x1]
      %v334 = vmax.f32 %v329, %v333
      %s335 = sadd.s32 %s145, 39
      %s336 = sld [smem:[#allocation3 + %s335]]
      %s337 = scalar_lea.vmem %s134, %s336
      %v338 = vld [vmem:[%s337] sm:$0x1]
      %v339 = vmax.f32 %v334, %v338
      %s340 = sadd.s32 %s145, 40
      %s341 = sld [smem:[#allocation3 + %s340]]
      %s342 = scalar_lea.vmem %s134, %s341
      %v343 = vld [vmem:[%s342] sm:$0x1]
      %s344 = sadd.s32 %s145, 41
      %s345 = sld [smem:[#allocation3 + %s344]]
      %s346 = scalar_lea.vmem %s134, %s345
      %v347 = vld [vmem:[%s346] sm:$0x1]
      %v348 = vmax.f32 %v343, %v347
      %s349 = sadd.s32 %s145, 42
      %s350 = sld [smem:[#allocation3 + %s349]]
      %s351 = scalar_lea.vmem %s134, %s350
      %v352 = vld [vmem:[%s351] sm:$0x1]
      %v353 = vmax.f32 %v348, %v352
      %s354 = sadd.s32 %s145, 43
      %s355 = sld [smem:[#allocation3 + %s354]]
      %s356 = scalar_lea.vmem %s134, %s355
      %v357 = vld [vmem:[%s356] sm:$0x1]
      %v358 = vmax.f32 %v353, %v357
      %s359 = sadd.s32 %s145, 44
      %s360 = sld [smem:[#allocation3 + %s359]]
      %s361 = scalar_lea.vmem %s134, %s360
      %v362 = vld [vmem:[%s361] sm:$0x1]
      %v363 = vmax.f32 %v358, %v362
      %s364 = sadd.s32 %s145, 45
      %s365 = sld [smem:[#allocation3 + %s364]]
      %s366 = scalar_lea.vmem %s134, %s365
      %v367 = vld [vmem:[%s366] sm:$0x1]
      %v368 = vmax.f32 %v363, %v367
      %s369 = sadd.s32 %s145, 46
      %s370 = sld [smem:[#allocation3 + %s369]]
      %s371 = scalar_lea.vmem %s134, %s370
      %v372 = vld [vmem:[%s371] sm:$0x1]
      %v373 = vmax.f32 %v368, %v372
      %s374 = sadd.s32 %s145, 47
      %s375 = sld [smem:[#allocation3 + %s374]]
      %s376 = scalar_lea.vmem %s134, %s375
      %v377 = vld [vmem:[%s376] sm:$0x1]
      %v378 = vmax.f32 %v373, %v377
      %s379 = sadd.s32 %s145, 48
      %s380 = sld [smem:[#allocation3 + %s379]]
      %s381 = scalar_lea.vmem %s134, %s380
      %v382 = vld [vmem:[%s381] sm:$0x1]
      %s383 = sadd.s32 %s145, 49
      %s384 = sld [smem:[#allocation3 + %s383]]
      %s385 = scalar_lea.vmem %s134, %s384
      %v386 = vld [vmem:[%s385] sm:$0x1]
      %v387 = vmax.f32 %v382, %v386
      %s388 = sadd.s32 %s145, 50
      %s389 = sld [smem:[#allocation3 + %s388]]
      %s390 = scalar_lea.vmem %s134, %s389
      %v391 = vld [vmem:[%s390] sm:$0x1]
      %v392 = vmax.f32 %v387, %v391
      %s393 = sadd.s32 %s145, 51
      %s394 = sld [smem:[#allocation3 + %s393]]
      %s395 = scalar_lea.vmem %s134, %s394
      %v396 = vld [vmem:[%s395] sm:$0x1]
      %v397 = vmax.f32 %v392, %v396
      %s398 = sadd.s32 %s145, 52
      %s399 = sld [smem:[#allocation3 + %s398]]
      %s400 = scalar_lea.vmem %s134, %s399
      %v401 = vld [vmem:[%s400] sm:$0x1]
      %v402 = vmax.f32 %v397, %v401
      %s403 = sadd.s32 %s145, 53
      %s404 = sld [smem:[#allocation3 + %s403]]
      %s405 = scalar_lea.vmem %s134, %s404
      %v406 = vld [vmem:[%s405] sm:$0x1]
      %v407 = vmax.f32 %v402, %v406
      %s408 = sadd.s32 %s145, 54
      %s409 = sld [smem:[#allocation3 + %s408]]
      %s410 = scalar_lea.vmem %s134, %s409
      %v411 = vld [vmem:[%s410] sm:$0x1]
      %v412 = vmax.f32 %v407, %v411
      %s413 = sadd.s32 %s145, 55
      %s414 = sld [smem:[#allocation3 + %s413]]
      %s415 = scalar_lea.vmem %s134, %s414
      %v416 = vld [vmem:[%s415] sm:$0x1]
      %v417 = vmax.f32 %v412, %v416
      %s418 = sadd.s32 %s145, 56
      %s419 = sld [smem:[#allocation3 + %s418]]
      %s420 = scalar_lea.vmem %s134, %s419
      %v421 = vld [vmem:[%s420] sm:$0x1]
      %s422 = sadd.s32 %s145, 57
      %s423 = sld [smem:[#allocation3 + %s422]]
      %s424 = scalar_lea.vmem %s134, %s423
      %v425 = vld [vmem:[%s424] sm:$0x1]
      %v426 = vmax.f32 %v421, %v425
      %s427 = sadd.s32 %s145, 58
      %s428 = sld [smem:[#allocation3 + %s427]]
      %s429 = scalar_lea.vmem %s134, %s428
      %v430 = vld [vmem:[%s429] sm:$0x1]
      %v431 = vmax.f32 %v426, %v430
      %s432 = sadd.s32 %s145, 59
      %s433 = sld [smem:[#allocation3 + %s432]]
      %s434 = scalar_lea.vmem %s134, %s433
      %v435 = vld [vmem:[%s434] sm:$0x1]
      %v436 = vmax.f32 %v431, %v435
      %s437 = sadd.s32 %s145, 60
      %s438 = sld [smem:[#allocation3 + %s437]]
      %s439 = scalar_lea.vmem %s134, %s438
      %v440 = vld [vmem:[%s439] sm:$0x1]
      %v441 = vmax.f32 %v436, %v440
      %s442 = sadd.s32 %s145, 61
      %s443 = sld [smem:[#allocation3 + %s442]]
      %s444 = scalar_lea.vmem %s134, %s443
      %v445 = vld [vmem:[%s444] sm:$0x1]
      %v446 = vmax.f32 %v441, %v445
      %s447 = sadd.s32 %s145, 62
      %s448 = sld [smem:[#allocation3 + %s447]]
      %s449 = scalar_lea.vmem %s134, %s448
      %v450 = vld [vmem:[%s449] sm:$0x1]
      %v451 = vmax.f32 %v446, %v450
      %s452 = sadd.s32 %s145, 63
      %s453 = sld [smem:[#allocation3 + %s452]]
      %s454 = scalar_lea.vmem %s134, %s453
      %v455 = vld [vmem:[%s454] sm:$0x1]
      %v456 = vmax.f32 %v451, %v455
      %v458 = vrot.slane %v222, 7
      %v461 = vrot.slane %v261, 6
      %v464 = vrot.slane %v300, 5
      %v467 = vrot.slane %v339, 4
      %v470 = vrot.slane %v378, 3
      %v473 = vrot.slane %v417, 2
      %v476 = vrot.slane %v456, 1
      %vm478 = vcmask 1040384
      %v479 = vsel %vm478, %v183, %v458
      %vm480 = vcmask 1041408
      %v481 = vsel %vm480, %v479, %v461
      %vm482 = vcmask 1042432
      %v483 = vsel %vm482, %v481, %v464
      %vm484 = vcmask 1043456
      %v485 = vsel %vm484, %v483, %v467
      %vm486 = vcmask 1044480
      %v487 = vsel %vm486, %v485, %v470
      %vm488 = vcmask 1045504
      %v489 = vsel %vm488, %v487, %v473
      %vm490 = vcmask 1046528
      %v491 = vsel %vm490, %v489, %v476
      %vm492 = vcmask 31744
      %493 = vst.msk [vmem:[%s141] sm:$0xff] %vm492, %v491
      %p494 = scmp.lt.s32.totalorder %s23, 1
      %s495 = scalar_select %p494, %s23, 1
      %p496 = scmp.lt.s32.totalorder %s24, 0
      %s497 = scalar_select %p496, %s24, 0
      %s498 = sadd.s32 %s497, %s495
      %s499 = smul.addr %s498, 8
      %s500 = scalar_lea.vmem %s2, %s499
      // Predicated region
      $region25: #{masked_max_pool.1} parent=23 // pred_check
        %p501 = pneg %p77
      $region26: #{masked_max_pool.1} parent=23 // pred_check_branch
        %503 = sbr.rel (%p501) target = $region28
      $region27: #{masked_max_pool.1} parent=23 // pred_region
        _
      $region28: #{masked_max_pool.1} parent=23 // pred_fallthru
        _
    $region24: #{masked_max_pool.1} parent=5 // pred_fallthru
      _
    %p504 = scmp.le.s32.totalorder 2, %s14
    // Predicated region
    $region29: #{masked_max_pool.1} parent=5 // pred_check
      %p505 = pneg %p504
    $region30: #{masked_max_pool.1} parent=5 // pred_check_branch
      %507 = sbr.rel (%p505) target = $region32
    $region31: #{masked_max_pool.1} parent=5 // pred_region
      %s508 = ssub.s32 %s14, 2
      // Predicated region
      $region33: #{masked_max_pool.1} parent=31 // pred_check
        %p509 = pneg %p83
      $region34: #{masked_max_pool.1} parent=31 // pred_check_branch
        %511 = sbr.rel (%p509) target = $region36
      $region35: #{masked_max_pool.1} parent=31 // pred_region
        %p512 = scmp.lt.s32.totalorder %s25, 1
        %s513 = scalar_select %p512, %s25, 1
        %p514 = scmp.lt.s32.totalorder %s26, 0
        %s515 = scalar_select %p514, %s26, 0
        %s516 = sadd.s32 %s515, %s513
        %s517 = smul.addr %s516, 8
        %s518 = scalar_lea.vmem %s2, %s517
      $region36: #{masked_max_pool.1} parent=31 // pred_fallthru
        _
    $region32: #{masked_max_pool.1} parent=5 // pred_fallthru
      _
  $region6: #{masked_max_pool.1} parent=0 // loop_footer
    %s18 = sadd.s32 1, %s14
  $region7: #{masked_max_pool.1} parent=0 // loop_footer_branch
    %13 = sbr.rel target = $region3
  $region8: #{masked_max_pool.1} parent=0 // loop_exit
    _

</llo_original>
